<compile_context>
chip_gen: v7x
topology: tpu7x:2x2x1
jax: 0.10.0
libtpu: 0.0.40
codegen_flags: <defaults>
</compile_context>

<pallas_src>
import functools

import jax
import jax.numpy as jnp
from jax.experimental import pallas as pl
from jax.experimental.pallas import tpu as pltpu


def rmsnorm_kernel(x_ref, w_ref, o_ref, *, eps, inv_d):
    # x_ref: (tile_rows, D)   w_ref: (1, D)   o_ref: (tile_rows, D)
    x = x_ref[...].astype(jnp.float32)
    # Single-pass reduction: sum of squares (XLU) * compile-time 1/D (VPU mul).
    ms = jnp.sum(x * x, axis=-1, keepdims=True) * inv_d
    inv = jax.lax.rsqrt(ms + eps)                      # EUP rsqrt
    # Match PyTorch: normalize in fp32, cast back to input dtype, then scale.
    xn = (x * inv).astype(o_ref.dtype)
    o_ref[...] = xn * w_ref[...].astype(o_ref.dtype)


def _round_up(x, m):
    return ((x + m - 1) // m) * m


def _round_down(x, m):
    return (x // m) * m


def rmsnorm(x, weight, *, eps=1e-6, target_tile_bytes=4 * 1024 * 1024):
    """RMSNorm over the last dim of x. weight has shape (x.shape[-1],)."""
    orig_shape = x.shape
    D = orig_shape[-1]
    x2 = x.reshape(-1, D)
    N = x2.shape[0]

    itemsize = jnp.dtype(x.dtype).itemsize
    # Sublane packing: f32 -> 8 rows, bf16 -> 16 rows, int8/fp8 -> 32 rows.
    row_align = 8 * max(1, 4 // itemsize)

    # Row tile sized by bytes (~4 MiB of input per grid step).
    tile = max(row_align,
               _round_down(target_tile_bytes // (D * itemsize), row_align))
    # v7x has 2 TensorCores per chip: ensure >= 2 "parallel" grid steps
    # whenever there is enough work to split.
    if N > row_align:
        tile = min(tile, max(row_align, _round_up((N + 1) // 2, row_align)))
    # Never exceed the (rounded-up) problem itself.
    tile = min(tile, _round_up(N, row_align))

    # Ragged last block: no host-side pad of x, no output slice afterwards.
    grid_n = pl.cdiv(N, tile)

    w2 = weight.reshape(1, D)
    kernel = functools.partial(rmsnorm_kernel, eps=eps, inv_d=1.0 / D)

    grid_spec = pltpu.PrefetchScalarGridSpec(
        num_scalar_prefetch=0,
        grid=(grid_n,),
        in_specs=[
            pl.BlockSpec((tile, D), lambda i: (i, 0)),   # row tile of x
            pl.BlockSpec((1, D), lambda i: (0, 0)),      # weight, resident
        ],
        out_specs=pl.BlockSpec((tile, D), lambda i: (i, 0)),
    )

    out = pl.pallas_call(
        kernel,
        out_shape=jax.ShapeDtypeStruct((N, D), x.dtype),
        grid_spec=grid_spec,
        compiler_params=pltpu.CompilerParams(
            dimension_semantics=("parallel",),
            vmem_limit_bytes=48 * 1024 * 1024,
        ),
    )(x2, w2)

    return out.reshape(orig_shape)


def reference(x, weight, eps=1e-6):
    """Pure-JAX reference matching the PyTorch RMSNorm forward."""
    xf = x.astype(jnp.float32)
    out = xf * jax.lax.rsqrt(jnp.mean(xf * xf, axis=-1, keepdims=True) + eps)
    out = out.astype(x.dtype)
    return out * weight.astype(x.dtype)


if __name__ == "__main__":
    jax.config.update('jax_default_matmul_precision', 'highest')

    key = jax.random.PRNGKey(0)
    kx, kw, kx2 = jax.random.split(key, 3)

    # Small shapes consistent with the module: RMSNorm over a hidden dim.
    B, L, D = 2, 16, 128
    x = jax.random.normal(kx, (B, L, D), jnp.float32)
    weight = 1.0 + 0.02 * jax.random.normal(kw, (D,), jnp.float32)

    out = jax.block_until_ready(rmsnorm(x, weight, eps=1e-6))
    ref = reference(x, weight, eps=1e-6)
    err = float(jnp.max(jnp.abs(out - ref)))
    assert jnp.allclose(out, ref, atol=1e-5, rtol=1e-5), f"max abs err = {err}"

    # Second shape exercising the ragged last row block (N=33 not a multiple
    # of the row tile) to lock in the no-pad / no-slice path.
    x_r = jax.random.normal(kx2, (3, 11, D), jnp.float32)
    out_r = jax.block_until_ready(rmsnorm(x_r, weight, eps=1e-6))
    ref_r = reference(x_r, weight, eps=1e-6)
    err_r = float(jnp.max(jnp.abs(out_r - ref_r)))
    assert jnp.allclose(out_r, ref_r, atol=1e-5, rtol=1e-5), f"max abs err = {err_r}"

    print("KERNEL_OK")
</pallas_src>

<mosaic_0001>
module attributes {stable_mosaic.version = 11 : i64} {
  func.func @rmsnorm_kernel(%arg0: i32, %arg1: memref<16x128xf32, #tpu.memory_space<vmem>>, %arg2: memref<1x128xf32, #tpu.memory_space<vmem>>, %arg3: memref<16x128xf32, #tpu.memory_space<vmem>>) attributes {dimension_semantics = [#tpu.dimension_semantics<parallel>], iteration_bounds = array<i64: 2>, scalar_prefetch = 0 : i64, scratch_operands = 0 : i64, tpu.core_type = #tpu.core_type<tc>, window_params = [{transform_indices = @transform_0, window_bounds = array<i64: 16, 128>}, {pipeline_mode = #tpu.pipeline_mode<synchronous>, transform_indices = @transform_1, window_bounds = array<i64: 1, 128>}, {transform_indices = @transform_2, window_bounds = array<i64: 16, 128>}]} {
    %c0 = arith.constant 0 : index
    %c0_0 = arith.constant 0 : index
    %0 = vector.load %arg1[%c0, %c0_0] : memref<16x128xf32, #tpu.memory_space<vmem>>, vector<16x128xf32>
    %1 = arith.mulf %0, %0 : vector<16x128xf32>
    %cst = arith.constant dense<0.000000e+00> : vector<16xf32>
    %2 = vector.multi_reduction <add>, %1, %cst [1] : vector<16x128xf32> to vector<16xf32>
    %3 = vector.shape_cast %2 : vector<16xf32> to vector<16x1xf32>
    %cst_1 = arith.constant 7.812500e-03 : f32
    %4 = vector.broadcast %cst_1 : f32 to vector<16x1xf32>
    %5 = arith.mulf %3, %4 : vector<16x1xf32>
    %cst_2 = arith.constant 9.99999997E-7 : f32
    %6 = vector.broadcast %cst_2 : f32 to vector<16x1xf32>
    %7 = arith.addf %5, %6 : vector<16x1xf32>
    %8 = math.rsqrt %7 : vector<16x1xf32>
    %9 = vector.broadcast %8 : vector<16x1xf32> to vector<16x128xf32>
    %10 = arith.mulf %0, %9 : vector<16x128xf32>
    %c0_3 = arith.constant 0 : index
    %c0_4 = arith.constant 0 : index
    %11 = vector.load %arg2[%c0_3, %c0_4] : memref<1x128xf32, #tpu.memory_space<vmem>>, vector<1x128xf32>
    %12 = vector.broadcast %11 : vector<1x128xf32> to vector<16x128xf32>
    %13 = arith.mulf %10, %12 : vector<16x128xf32>
    %c0_5 = arith.constant 0 : index
    %c0_6 = arith.constant 0 : index
    %14 = vector.load %arg3[%c0_5, %c0_6] : memref<16x128xf32, #tpu.memory_space<vmem>>, vector<16x128xf32>
    tpu.vector_store %arg3[%c0_5, %c0_6], %13 {strides = array<i32>} : memref<16x128xf32, #tpu.memory_space<vmem>>, vector<16x128xf32>,
    return
  }
  func.func @transform_0(%arg0: i32) -> (i32, i32) {
    %c0_i32 = arith.constant 0 : i32
    %c0_i32_0 = arith.constant 0 : i32
    return %arg0, %c0_i32 : i32, i32
  }
  func.func @transform_1(%arg0: i32) -> (i32, i32) {
    %c0_i32 = arith.constant 0 : i32
    %c0_i32_0 = arith.constant 0 : i32
    %c0_i32_1 = arith.constant 0 : i32
    return %c0_i32, %c0_i32_0 : i32, i32
  }
  func.func @transform_2(%arg0: i32) -> (i32, i32) {
    %c0_i32 = arith.constant 0 : i32
    %c0_i32_0 = arith.constant 0 : i32
    return %arg0, %c0_i32 : i32, i32
  }
}

</mosaic_0001>

<llo_original>
// kernel: tpu_custom_call.1
$region0: #{tpu_custom_call.1}
  #allocation0 [shape = 'u32[]', space=smem, size = 0x4, offset = 0x4, fixed_abs, tag = 'smem constant byte address 0x4 - core index']
  #allocation1 [shape = 'u32[144,128]{1,0:T(1,128)}', space=vmem, size = 0x12000, scoped, tag = 'internal scratch']
  %s0 = inlined_call_operand.hbm [shape: f32[32,128], index: 0, kind: input, shape index: {}]
  %s1 = inlined_call_operand.vmem [shape: f32[1,128], index: 1, kind: input, shape index: {}]
  %s2 = inlined_call_operand.hbm [shape: f32[32,128], index: 2, kind: output, shape index: {}]
  %s3 = sld [smem:[#allocation0]]
  $region45: #{tpu_custom_call.1} parent=0
    _
  %s5 = ssub.s32 1, %s3
  %s6 = scalar_select 0, %s5, %s3
  $region1: #{tpu_custom_call.1} parent=0
    #allocation2 [shape = 'u8[16384]{0}', space=vmem, size = 0x4000, scoped, tag = 'input window, operand 0']
    #allocation3 [shape = 's32[2]{0}', space=sflag, size = 0x8, scoped, tag = 'scoped memory for tpu_custom_call.1']
    #allocation4 [shape = 's32[2]{0}', space=sflag, size = 0x8, scoped, tag = 'scoped memory for tpu_custom_call.1']
    #allocation5 [shape = 'u8[16384]{0}', space=vmem, size = 0x4000, scoped, tag = 'output window, operand 0']
    %7 = vsyncpa [#allocation3], 0
    %s8 = scalar_lea.sflag [#allocation3], 1
    %9 = vsyncpa %s8, 0
    %10 = vsyncpa [#allocation4], 0
    %s11 = scalar_lea.sflag [#allocation4], 1
    %12 = vsyncpa %s11, 0
    loop: start=0, step=1, limit=4
    $region2: #{tpu_custom_call.1} parent=1 // loop_pre_header
      _
    $region3: #{tpu_custom_call.1} parent=1 // loop_header
      %s14 = sphi 0, %s18
      %p15 = scmp.ge.s32.totalorder %s14, 4
      %s24 = sphi 0, %s26
      %s27 = sphi 0, %s24
      %s28 = sphi 0, %s27
      %s44 = sphi 0, %s28
      %s48 = sphi 0, %s48
      %s50 = sphi 0, %s48
      %s51 = sphi 0, %s50
      %s65 = sphi 0, %s51
      %s71 = sphi 0, %s73
      %s74 = sphi 0, %s71
      %s75 = sphi 0, %s74
      %s91 = sphi 0, %s75
    $region4: #{tpu_custom_call.1} parent=1 // loop_header_branch
      %17 = sbr.rel (%p15) target = $region8
    $region5: #{tpu_custom_call.1} parent=1 // loop_body
      %s19 = ssub.s32 %s14, 1
      %s20 = ssub.s32 %s14, 2
      %s21 = sadd.s32 %s14, 1
      %s22 = ssub.s32 %s14, %s21
      %p23 = scmp.eq.s32.totalorder %s22, 0
      %s25 = sadd.s32 %s24, 1
      %s26 = scalar_select %p23, %s24, %s25
      %p29 = pneg %p23
      %p30 = scmp.eq.s32.totalorder %s14, 1
      %p31 = por %p29, %p30
      %p32 = scmp.ne.s32.totalorder %s24, %s27
      %p33 = scmp.eq.s32.totalorder %s14, 0
      %p34 = por %p32, %p33
      %p35 = scmp.ne.s32.totalorder %s24, %s27
      %p36 = scmp.eq.s32.totalorder %s19, 1
      %p37 = por %p35, %p36
      %p38 = scmp.ne.s32.totalorder %s27, %s28
      %p39 = scmp.eq.s32.totalorder %s19, 0
      %p40 = por %p38, %p39
      %p41 = scmp.ne.s32.totalorder %s27, %s28
      %p42 = scmp.eq.s32.totalorder %s20, 1
      %p43 = por %p41, %p42
      %p45 = scmp.ne.s32.totalorder %s28, %s44
      %p46 = scmp.eq.s32.totalorder %s20, 0
      %p47 = por %p45, %p46
      %s49 = sadd.s32 %s48, 1
      %p52 = scmp.eq.s32.totalorder %s14, 1
      %p53 = scmp.ne.s32.totalorder %s48, %s50
      %p54 = scmp.eq.s32.totalorder %s14, 0
      %p55 = por %p53, %p54
      %p56 = scmp.ne.s32.totalorder %s48, %s50
      %p57 = scmp.eq.s32.totalorder %s19, 1
      %p58 = por %p56, %p57
      %p59 = scmp.ne.s32.totalorder %s50, %s51
      %p60 = scmp.eq.s32.totalorder %s19, 0
      %p61 = por %p59, %p60
      %p62 = scmp.ne.s32.totalorder %s50, %s51
      %p63 = scmp.eq.s32.totalorder %s20, 1
      %p64 = por %p62, %p63
      %p66 = scmp.ne.s32.totalorder %s51, %s65
      %p67 = scmp.eq.s32.totalorder %s20, 0
      %p68 = por %p66, %p67
      %s69 = ssub.s32 %s14, %s21
      %p70 = scmp.eq.s32.totalorder %s69, 0
      %s72 = sadd.s32 %s71, 1
      %s73 = scalar_select %p70, %s71, %s72
      %p76 = pneg %p70
      %p77 = scmp.eq.s32.totalorder %s14, 1
      %p78 = por %p76, %p77
      %p79 = scmp.ne.s32.totalorder %s71, %s74
      %p80 = scmp.eq.s32.totalorder %s14, 0
      %p81 = por %p79, %p80
      %p82 = scmp.ne.s32.totalorder %s71, %s74
      %p83 = scmp.eq.s32.totalorder %s19, 1
      %p84 = por %p82, %p83
      %p85 = scmp.ne.s32.totalorder %s74, %s75
      %p86 = scmp.eq.s32.totalorder %s19, 0
      %p87 = por %p85, %p86
      %p88 = scmp.ne.s32.totalorder %s74, %s75
      %p89 = scmp.eq.s32.totalorder %s20, 1
      %p90 = por %p88, %p89
      %p92 = scmp.ne.s32.totalorder %s75, %s91
      %p93 = scmp.eq.s32.totalorder %s20, 0
      %p94 = por %p92, %p93
      %p95 = scmp.le.s32.totalorder 1, %s14
      %p96 = scmp.lt.s32.totalorder %s14, 3
      %p97 = pnand %p95, %p96
      %p98 = pneg %p97
      // Predicated region
      $region9: #{tpu_custom_call.1} parent=5 // pred_check
        _
      $region10: #{tpu_custom_call.1} parent=5 // pred_check_branch
        %100 = sbr.rel (%p97) target = $region12
      $region11: #{tpu_custom_call.1} parent=5 // pred_region
        %s101 = ssub.s32 %s14, 1
        // Predicated region
        $region13: #{tpu_custom_call.1} parent=11 // pred_check
          %p102 = pneg %p61
        $region14: #{tpu_custom_call.1} parent=11 // pred_check_branch
          %104 = sbr.rel (%p102) target = $region16
        $region15: #{tpu_custom_call.1} parent=11 // pred_region
          _
        $region16: #{tpu_custom_call.1} parent=11 // pred_fallthru
          _
      $region12: #{tpu_custom_call.1} parent=5 // pred_fallthru
        _
      %p105 = scmp.lt.s32.totalorder %s14, 2
      // Predicated region
      $region17: #{tpu_custom_call.1} parent=5 // pred_check
        %p106 = pneg %p105
      $region18: #{tpu_custom_call.1} parent=5 // pred_check_branch
        %108 = sbr.rel (%p106) target = $region20
      $region19: #{tpu_custom_call.1} parent=5 // pred_region
        // Predicated region
        $region21: #{tpu_custom_call.1} parent=19 // pred_check
          %p109 = pneg %p34
        $region22: #{tpu_custom_call.1} parent=19 // pred_check_branch
          %111 = sbr.rel (%p109) target = $region24
        $region23: #{tpu_custom_call.1} parent=19 // pred_region
          %s112 = sand.u32 %s24, 1
          %s113 = scalar_lea.sflag [#allocation3], %s112
          %s114 = sand.u32 %s24, 1
          %s115 = smul.addr %s114, 16
          %s116 = scalar_lea.vmem [#allocation2], %s115
          %s117 = smul.u32 2, %s14
          %s119 = ssub.s32 256, 256
          %120 = vsyncadd %s113, %s119
          %s121 = smul.addr %s117, 128
          %s122 = scalar_lea.hbm %s0, %s121
          %s123 = sshll.u32 %s116, 4
          %s124 = int_to_ptr.vmem [resolvable:$true] %s123
          %129 = dma.hbm_to_vmem [thread:$0]  %s122, 256, %s124, %s113, 128, 128, 8
        $region24: #{tpu_custom_call.1} parent=19 // pred_fallthru
          _
      $region20: #{tpu_custom_call.1} parent=5 // pred_fallthru
        _
      %p130 = scmp.le.s32.totalorder 1, %s14
      %p131 = scmp.lt.s32.totalorder %s14, 3
      %p132 = pnand %p130, %p131
      %p133 = pneg %p132
      // Predicated region
      $region25: #{tpu_custom_call.1} parent=5 // pred_check
        _
      $region26: #{tpu_custom_call.1} parent=5 // pred_check_branch
        %135 = sbr.rel (%p132) target = $region28
      $region27: #{tpu_custom_call.1} parent=5 // pred_region
        %s136 = ssub.s32 %s14, 1
        %s137 = sand.u32 %s27, 1
        %s138 = scalar_lea.sflag [#allocation3], %s137
        %s139 = sand.u32 %s27, 1
        %s140 = smul.addr %s139, 16
        %s141 = scalar_lea.vmem [#allocation2], %s140
        // Predicated region
        $region29: #{tpu_custom_call.1} parent=27 // pred_check
          %p142 = pneg %p40
        $region30: #{tpu_custom_call.1} parent=27 // pred_check_branch
          %144 = sbr.rel (%p142) target = $region32
        $region31: #{tpu_custom_call.1} parent=27 // pred_region
          %145 = dma.done %s138, 256
        $region32: #{tpu_custom_call.1} parent=27 // pred_fallthru
          _
        %s146 = sand.u32 %s27, 1
        %s147 = scalar_lea.sflag [#allocation3], %s146
        %s148 = sand.u32 %s27, 1
        %s149 = smul.addr %s148, 16
        %s150 = scalar_lea.vmem [#allocation2], %s149
        %p151 = pneg %p40
        %p152 = pneg %p37
        %p153 = pneg %p61
        %p154 = pneg %p58
        %p155 = pneg %p87
        %p156 = pneg %p84
        %s157 = sand.u32 %s74, 1
        %s158 = scalar_lea.sflag [#allocation4], %s157
        %s159 = sand.u32 %s74, 1
        %s160 = smul.addr %s159, 16
        %s161 = scalar_lea.vmem [#allocation5], %s160
        %s162 = smul.u32 2, %s19
        %s163 = smul.u32 2, %s19
        %v164 = vld [vmem:[%s141] sm:$0xff]
        %v165 = vld [vmem:[%s141 + $0x8] sm:$0xff]
        %v166 = vmul.f32 %v164, %v164
        %v167 = vmul.f32 %v165, %v165
        %168 = vadd.xlane.f32.xlu0 %v166
        %v169 = vpop.xlane.xlu0 %168
        %170 = vadd.xlane.f32.xlu0 %v167
        %v171 = vpop.xlane.xlu0 %170
        %v172 = vmul.f32 %v169, 0.0078125
        %v173 = vmul.f32 %v171, 0.0078125
        %v174 = vadd.f32 %v172, 1e-06
        %v175 = vadd.f32 %v173, 1e-06
        %v176 = vrsqrt.pop %v174
        %v177 = vrsqrt.pop %v175
        %v178 = vmul.f32 %v164, %v176
        %v179 = vmul.f32 %v165, %v177
        %v180 = vld [vmem:[%s1] sm:$0x1]
        %v182 = vlaneseq
        %v183 = vshrl.u32 %v182, 7
        %v184 = vsub.s32 0, %v183
        %v185 = vrot.slane %v180, %v184
        %v187 = vmul.f32 %v178, %v185
        %v188 = vmul.f32 %v179, %v185
        %189 = vst [vmem:[%s161] sm:$0xff] %v187
        %190 = vst [vmem:[%s161 + $0x8] sm:$0xff] %v188
        %s191 = sand.u32 %s74, 1
        %s192 = scalar_lea.sflag [#allocation4], %s191
        %s193 = sand.u32 %s74, 1
        %s194 = smul.addr %s193, 16
        %s195 = scalar_lea.vmem [#allocation5], %s194
        // Predicated region
        $region33: #{tpu_custom_call.1} parent=27 // pred_check
          %p196 = pneg %p84
        $region34: #{tpu_custom_call.1} parent=27 // pred_check_branch
          %198 = sbr.rel (%p196) target = $region36
        $region35: #{tpu_custom_call.1} parent=27 // pred_region
          %s199 = smul.u32 2, %s19
          %s201 = ssub.s32 256, 256
          %202 = vsyncadd %s192, %s201
          %s203 = smul.addr %s199, 128
          %s204 = scalar_lea.hbm %s2, %s203
          %s205 = sshll.u32 %s195, 4
          %s206 = int_to_ptr.vmem [resolvable:$true] %s205
          %211 = dma.vmem_to_hbm [thread:$0]  %s206, 256, %s204, %s192, 128, 128, 8
        $region36: #{tpu_custom_call.1} parent=27 // pred_fallthru
          _
      $region28: #{tpu_custom_call.1} parent=5 // pred_fallthru
        _
      %p212 = scmp.le.s32.totalorder 2, %s14
      // Predicated region
      $region37: #{tpu_custom_call.1} parent=5 // pred_check
        %p213 = pneg %p212
      $region38: #{tpu_custom_call.1} parent=5 // pred_check_branch
        %215 = sbr.rel (%p213) target = $region40
      $region39: #{tpu_custom_call.1} parent=5 // pred_region
        %s216 = ssub.s32 %s14, 2
        // Predicated region
        $region41: #{tpu_custom_call.1} parent=39 // pred_check
          %p217 = pneg %p90
        $region42: #{tpu_custom_call.1} parent=39 // pred_check_branch
          %219 = sbr.rel (%p217) target = $region44
        $region43: #{tpu_custom_call.1} parent=39 // pred_region
          %s220 = sand.u32 %s75, 1
          %s221 = scalar_lea.sflag [#allocation4], %s220
          %s222 = sand.u32 %s75, 1
          %s223 = smul.addr %s222, 16
          %s224 = scalar_lea.vmem [#allocation5], %s223
          %225 = dma.done %s221, 256
        $region44: #{tpu_custom_call.1} parent=39 // pred_fallthru
          _
      $region40: #{tpu_custom_call.1} parent=5 // pred_fallthru
        _
    $region6: #{tpu_custom_call.1} parent=1 // loop_footer
      %s18 = sadd.s32 1, %s14
    $region7: #{tpu_custom_call.1} parent=1 // loop_footer_branch
      %13 = sbr.rel target = $region3
    $region8: #{tpu_custom_call.1} parent=1 // loop_exit
      _
    %226 = vsyncpa [#allocation3], 1
    %s227 = scalar_lea.sflag [#allocation3], 1
    %228 = vsyncpa %s227, 1
    %229 = vsyncpa [#allocation4], 1
    %s230 = scalar_lea.sflag [#allocation4], 1
    %231 = vsyncpa %s230, 1

</llo_original>
